<compile_context>
chip_gen: v7x
topology: tpu7x:2x2x1
jax: 0.10.0
libtpu: 0.0.40
codegen_flags: <defaults>
</compile_context>

<pallas_src>
import math

import jax
import jax.numpy as jnp
from jax.experimental import pallas as pl
from jax.experimental.pallas import tpu as pltpu


def _round_up(x, n):
    return (x + n - 1) // n * n


def _make_arcface_kernel(s, cos_m, sin_m, th, mm, easy_margin, mxu_dtype):
    def kernel(x_ref, w_ref, label_ref, out_ref):
        j = pl.program_id(1)                 # class-tile index
        tc = w_ref.shape[0]
        d = w_ref.shape[1]

        x = x_ref[...].astype(jnp.float32)   # (tb, D)
        w = w_ref[...].astype(jnp.float32)   # (tc, D)

        eps2 = 1e-24                         # (PyTorch F.normalize eps=1e-12)^2

        # Row inverse L2 norms.  rsqrt goes to the EUP slot (no VALU divides).
        inv_x = jax.lax.rsqrt(
            jnp.maximum(jnp.sum(x * x, axis=-1, keepdims=True), eps2))  # (tb, 1)

        # W-tile inverse norms, produced directly as a (1, tc) lane-oriented
        # row via a tiny (1, D) @ (D, tc) MXU matmul (avoids a transpose).
        w_ssq = jax.lax.dot_general(
            jnp.ones((1, d), jnp.float32), w * w,
            dimension_numbers=(((1,), (1,)), ((), ())),
            preferred_element_type=jnp.float32)                          # (1, tc)
        inv_w = jax.lax.rsqrt(jnp.maximum(w_ssq, eps2))                  # (1, tc)

        # Raw matmul on un-normalized tiles, contracting D against D
        # (no wn.T), f32 accumulation regardless of operand dtype.
        raw = jax.lax.dot_general(
            x.astype(mxu_dtype), w.astype(mxu_dtype),
            dimension_numbers=(((1,), (1,)), ((), ())),
            preferred_element_type=jnp.float32)                          # (tb, tc)
        cosine = raw * inv_x * inv_w                                     # (tb, tc)

        # One-hot mask for this class tile (iota offset by the tile base).
        labels = label_ref[...]                                          # (tb, 1)
        classes = j * tc + jax.lax.broadcasted_iota(jnp.int32, cosine.shape, 1)
        mask = classes == labels                                         # (tb, tc)

        # Margin math only for the label column (a (tb, 1) vector).
        cos_y = jnp.sum(jnp.where(mask, cosine, 0.0), axis=-1, keepdims=True)
        sin_y = jnp.sqrt(jnp.maximum(1.0 - cos_y * cos_y, 0.0))
        phi_y = cos_y * cos_m - sin_y * sin_m
        if easy_margin:
            phi_y = jnp.where(cos_y > 0.0, phi_y, cos_y)
        else:
            phi_y = jnp.where(cos_y > th, phi_y, cos_y - mm)

        out = (cosine + jnp.where(mask, phi_y - cos_y, 0.0)) * s
        out_ref[...] = out.astype(out_ref.dtype)

    return kernel


def arc_margin_product(x, weight, label, *, s=30.0, m=0.5, easy_margin=False,
                       block_b=128, block_c=512, mxu_dtype=jnp.float32):
    """ArcFace forward.  x: (B, D), weight: (C, D), label: (B,) int.
    Returns (B, C) float32 scaled logits (same semantics as the torch module)."""
    B, D = x.shape
    C, D2 = weight.shape
    assert D == D2

    cos_m = math.cos(m)
    sin_m = math.sin(m)
    th = math.cos(math.pi - m)
    mm = math.sin(math.pi - m) * m

    # Batch tile: multiple of 8 (sublanes); class tile: multiple of 128
    # (lane-dense output stores).  Pad, slice off after the call.
    tb = min(block_b, _round_up(B, 8))
    tc = min(block_c, _round_up(C, 128))
    B_pad = _round_up(B, tb)
    C_pad = _round_up(C, tc)

    xf = x.astype(jnp.float32)
    wf = weight.astype(jnp.float32)
    lab = label.astype(jnp.int32).reshape(B, 1)
    if B_pad != B:
        xf = jnp.pad(xf, ((0, B_pad - B), (0, 0)))
        lab = jnp.pad(lab, ((0, B_pad - B), (0, 0)))
    if C_pad != C:
        wf = jnp.pad(wf, ((0, C_pad - C), (0, 0)))

    grid = (B_pad // tb, C_pad // tc)

    # Rough VMEM budget: double-buffered x / W / label tiles + out tile + temps.
    vmem_est = 4 * (2 * tb * D + 2 * tc * D + 2 * tb * 128 + 6 * tb * tc)
    vmem_limit = int(min(max(vmem_est, 32 * 1024 * 1024), 64 * 1024 * 1024))

    kernel = _make_arcface_kernel(s, cos_m, sin_m, th, mm, easy_margin, mxu_dtype)

    out = pl.pallas_call(
        kernel,
        out_shape=jax.ShapeDtypeStruct((B_pad, C_pad), jnp.float32),
        grid=grid,
        in_specs=[
            pl.BlockSpec((tb, D), lambda i, j: (i, 0)),   # x tile
            pl.BlockSpec((tc, D), lambda i, j: (j, 0)),   # W tile (streamed)
            pl.BlockSpec((tb, 1), lambda i, j: (i, 0)),   # labels
        ],
        out_specs=pl.BlockSpec((tb, tc), lambda i, j: (i, j)),
        compiler_params=pltpu.CompilerParams(
            dimension_semantics=("parallel", "parallel"),
            vmem_limit_bytes=vmem_limit,
        ),
    )(xf, wf, lab)

    return out[:B, :C]


def _reference(x, weight, label, *, s=30.0, m=0.5, easy_margin=False):
    cos_m, sin_m = math.cos(m), math.sin(m)
    th = math.cos(math.pi - m)
    mm = math.sin(math.pi - m) * m
    xn = x / jnp.maximum(jnp.linalg.norm(x, axis=1, keepdims=True), 1e-12)
    wn = weight / jnp.maximum(jnp.linalg.norm(weight, axis=1, keepdims=True), 1e-12)
    cosine = xn @ wn.T
    sine = jnp.sqrt(jnp.maximum(1.0 - cosine**2, 0.0))
    phi = cosine * cos_m - sine * sin_m
    if easy_margin:
        phi = jnp.where(cosine > 0.0, phi, cosine)
    else:
        phi = jnp.where(cosine > th, phi, cosine - mm)
    one_hot = jax.nn.one_hot(label, cosine.shape[1], dtype=jnp.float32)
    return (one_hot * phi + (1.0 - one_hot) * cosine) * s


if __name__ == "__main__":
    key = jax.random.PRNGKey(0)
    k1, k2, k3, k4, k5, k6 = jax.random.split(key, 6)

    # --- Test 1: module-default config at small shapes --------------------
    B, D, C = 8, 32, 16
    x = jax.random.normal(k1, (B, D), dtype=jnp.float32)
    bound = math.sqrt(6.0 / (D + C))                      # xavier_uniform
    w = jax.random.uniform(k2, (C, D), dtype=jnp.float32, minval=-bound, maxval=bound)
    lab = jax.random.randint(k3, (B,), 0, C, dtype=jnp.int32)

    out = jax.block_until_ready(arc_margin_product(x, w, lab, s=30.0, m=0.5))
    ref = _reference(x, w, lab, s=30.0, m=0.5)
    assert out.shape == (B, C)
    assert jnp.allclose(out, ref, rtol=2e-3, atol=2e-3)

    # --- Test 2: padding + multi-tile (batch, class) grid + easy_margin ---
    B2, D2, C2 = 12, 40, 200
    x2 = jax.random.normal(k4, (B2, D2), dtype=jnp.float32)
    bound2 = math.sqrt(6.0 / (D2 + C2))
    w2 = jax.random.uniform(k5, (C2, D2), dtype=jnp.float32, minval=-bound2, maxval=bound2)
    lab2 = jax.random.randint(k6, (B2,), 0, C2, dtype=jnp.int32)

    out2 = jax.block_until_ready(
        arc_margin_product(x2, w2, lab2, easy_margin=True, block_b=8, block_c=128))
    ref2 = _reference(x2, w2, lab2, easy_margin=True)
    assert out2.shape == (B2, C2)
    assert jnp.allclose(out2, ref2, rtol=2e-3, atol=2e-3)

    # --- Test 3: bf16 MXU operands, f32 accumulate + f32 epilogue ---------
    # (loose tolerance: bf16 operand rounding; validate against production m
    #  before enabling in training.)
    out_bf16 = jax.block_until_ready(
        arc_margin_product(x, w, lab, mxu_dtype=jnp.bfloat16))
    assert jnp.allclose(out_bf16, ref, rtol=0.0, atol=0.5)

    print("KERNEL_OK")
</pallas_src>

<mosaic_0001>
module attributes {stable_mosaic.version = 11 : i64} {
  func.func @kernel(%arg0: i32, %arg1: i32, %arg2: memref<8x32xf32, #tpu.memory_space<vmem>>, %arg3: memref<128x32xf32, #tpu.memory_space<vmem>>, %arg4: memref<8x1xi32, #tpu.memory_space<vmem>>, %arg5: memref<8x128xf32, #tpu.memory_space<vmem>>) attributes {dimension_semantics = [#tpu.dimension_semantics<parallel>, #tpu.dimension_semantics<parallel>], iteration_bounds = array<i64: 1, 1>, scalar_prefetch = 0 : i64, scratch_operands = 0 : i64, tpu.core_type = #tpu.core_type<tc>, window_params = [{transform_indices = @transform_0, window_bounds = array<i64: 8, 32>}, {transform_indices = @transform_1, window_bounds = array<i64: 128, 32>}, {transform_indices = @transform_2, window_bounds = array<i64: 8, 1>}, {transform_indices = @transform_3, window_bounds = array<i64: 8, 128>}]} {
    %c0 = arith.constant 0 : index
    %c0_0 = arith.constant 0 : index
    %0 = vector.load %arg2[%c0, %c0_0] : memref<8x32xf32, #tpu.memory_space<vmem>>, vector<8x32xf32>
    %c0_1 = arith.constant 0 : index
    %c0_2 = arith.constant 0 : index
    %1 = vector.load %arg3[%c0_1, %c0_2] : memref<128x32xf32, #tpu.memory_space<vmem>>, vector<128x32xf32>
    %2 = arith.mulf %0, %0 : vector<8x32xf32>
    %cst = arith.constant dense<0.000000e+00> : vector<8xf32>
    %3 = vector.multi_reduction <add>, %2, %cst [1] : vector<8x32xf32> to vector<8xf32>
    %4 = vector.shape_cast %3 : vector<8xf32> to vector<8x1xf32>
    %cst_3 = arith.constant 1.000000e-24 : f32
    %5 = vector.broadcast %cst_3 : f32 to vector<8x1xf32>
    %6 = arith.maximumf %4, %5 : vector<8x1xf32>
    %7 = math.rsqrt %6 : vector<8x1xf32>
    %cst_4 = arith.constant 1.000000e+00 : f32
    %8 = vector.broadcast %cst_4 : f32 to vector<1x32xf32>
    %9 = arith.mulf %1, %1 : vector<128x32xf32>
    %cst_5 = arith.constant dense<0.000000e+00> : vector<1x128xf32>
    %10 = tpu.matmul %8, %9, %cst_5 {dimension_numbers = #tpu.dot_dimension_numbers<[1], [1], [0], [0], [0, 0, 1, 0], [], []>} : vector<1x32xf32>, vector<128x32xf32>, vector<1x128xf32> -> vector<1x128xf32>
    %cst_6 = arith.constant 1.000000e-24 : f32
    %11 = vector.broadcast %cst_6 : f32 to vector<1x128xf32>
    %12 = arith.maximumf %10, %11 : vector<1x128xf32>
    %13 = math.rsqrt %12 : vector<1x128xf32>
    %cst_7 = arith.constant dense<0.000000e+00> : vector<8x128xf32>
    %14 = tpu.matmul %0, %1, %cst_7 {dimension_numbers = #tpu.dot_dimension_numbers<[1], [1], [0], [0], [0, 0, 1, 0], [], []>} : vector<8x32xf32>, vector<128x32xf32>, vector<8x128xf32> -> vector<8x128xf32>
    %15 = vector.broadcast %7 : vector<8x1xf32> to vector<8x128xf32>
    %16 = arith.mulf %14, %15 : vector<8x128xf32>
    %17 = vector.broadcast %13 : vector<1x128xf32> to vector<8x128xf32>
    %18 = arith.mulf %16, %17 : vector<8x128xf32>
    %c0_8 = arith.constant 0 : index
    %c0_9 = arith.constant 0 : index
    %19 = vector.load %arg4[%c0_8, %c0_9] : memref<8x1xi32, #tpu.memory_space<vmem>>, vector<8x1xi32>
    %c128_i32 = arith.constant 128 : i32
    %20 = arith.muli %arg1, %c128_i32 : i32
    %21 = tpu.iota {dimensions = array<i32: 1>} : vector<8x128xi32>
    %22 = vector.broadcast %20 : i32 to vector<8x128xi32>
    %23 = arith.addi %22, %21 : vector<8x128xi32>
    %24 = vector.broadcast %19 : vector<8x1xi32> to vector<8x128xi32>
    %25 = arith.cmpi eq, %23, %24 : vector<8x128xi32>
    %cst_10 = arith.constant 0.000000e+00 : f32
    %26 = vector.broadcast %cst_10 : f32 to vector<8x128xf32>
    %27 = arith.select %25, %18, %26 : vector<8x128xi1>, vector<8x128xf32>
    %cst_11 = arith.constant dense<0.000000e+00> : vector<8xf32>
    %28 = vector.multi_reduction <add>, %27, %cst_11 [1] : vector<8x128xf32> to vector<8xf32>
    %29 = vector.shape_cast %28 : vector<8xf32> to vector<8x1xf32>
    %30 = arith.mulf %29, %29 : vector<8x1xf32>
    %cst_12 = arith.constant 1.000000e+00 : f32
    %31 = vector.broadcast %cst_12 : f32 to vector<8x1xf32>
    %32 = arith.subf %31, %30 : vector<8x1xf32>
    %cst_13 = arith.constant 0.000000e+00 : f32
    %33 = vector.broadcast %cst_13 : f32 to vector<8x1xf32>
    %34 = arith.maximumf %32, %33 : vector<8x1xf32>
    %35 = math.sqrt %34 : vector<8x1xf32>
    %cst_14 = arith.constant 0.87758255 : f32
    %36 = vector.broadcast %cst_14 : f32 to vector<8x1xf32>
    %37 = arith.mulf %29, %36 : vector<8x1xf32>
    %cst_15 = arith.constant 0.47942555 : f32
    %38 = vector.broadcast %cst_15 : f32 to vector<8x1xf32>
    %39 = arith.mulf %35, %38 : vector<8x1xf32>
    %40 = arith.subf %37, %39 : vector<8x1xf32>
    %cst_16 = arith.constant -0.87758255 : f32
    %41 = vector.broadcast %cst_16 : f32 to vector<8x1xf32>
    %42 = arith.cmpf ogt, %29, %41 : vector<8x1xf32>
    %cst_17 = arith.constant 0.239712775 : f32
    %43 = vector.broadcast %cst_17 : f32 to vector<8x1xf32>
    %44 = arith.subf %29, %43 : vector<8x1xf32>
    %45 = arith.select %42, %40, %44 : vector<8x1xi1>, vector<8x1xf32>
    %46 = arith.subf %45, %29 : vector<8x1xf32>
    %cst_18 = arith.constant 0.000000e+00 : f32
    %47 = vector.shape_cast %46 : vector<8x1xf32> to vector<8x1xf32>
    %48 = vector.broadcast %47 : vector<8x1xf32> to vector<8x128xf32>
    %49 = vector.broadcast %cst_18 : f32 to vector<8x128xf32>
    %50 = arith.select %25, %48, %49 : vector<8x128xi1>, vector<8x128xf32>
    %51 = arith.addf %18, %50 : vector<8x128xf32>
    %cst_19 = arith.constant 3.000000e+01 : f32
    %52 = vector.broadcast %cst_19 : f32 to vector<8x128xf32>
    %53 = arith.mulf %51, %52 : vector<8x128xf32>
    %c0_20 = arith.constant 0 : index
    %c0_21 = arith.constant 0 : index
    %54 = vector.load %arg5[%c0_20, %c0_21] : memref<8x128xf32, #tpu.memory_space<vmem>>, vector<8x128xf32>
    tpu.vector_store %arg5[%c0_20, %c0_21], %53 {strides = array<i32>} : memref<8x128xf32, #tpu.memory_space<vmem>>, vector<8x128xf32>,
    return
  }
  func.func @transform_0(%arg0: i32, %arg1: i32) -> (i32, i32) {
    %c0_i32 = arith.constant 0 : i32
    %c0_i32_0 = arith.constant 0 : i32
    return %arg0, %c0_i32 : i32, i32
  }
  func.func @transform_1(%arg0: i32, %arg1: i32) -> (i32, i32) {
    %c0_i32 = arith.constant 0 : i32
    %c0_i32_0 = arith.constant 0 : i32
    return %arg1, %c0_i32 : i32, i32
  }
  func.func @transform_2(%arg0: i32, %arg1: i32) -> (i32, i32) {
    %c0_i32 = arith.constant 0 : i32
    %c0_i32_0 = arith.constant 0 : i32
    return %arg0, %c0_i32 : i32, i32
  }
  func.func @transform_3(%arg0: i32, %arg1: i32) -> (i32, i32) {
    %c0_i32 = arith.constant 0 : i32
    return %arg0, %arg1 : i32, i32
  }
}

</mosaic_0001>

<llo_original>
// kernel: tpu_custom_call.1
$region0: #{tpu_custom_call.1}
  #allocation0 [shape = 'u32[]', space=smem, size = 0x4, offset = 0x4, fixed_abs, tag = 'smem constant byte address 0x4 - core index']
  #allocation1 [shape = 'u32[144,128]{1,0:T(1,128)}', space=vmem, size = 0x12000, scoped, tag = 'internal scratch']
  %s0 = inlined_call_operand.vmem [shape: f32[8,32], index: 0, kind: input, shape index: {}]
  %s1 = inlined_call_operand.vmem [shape: f32[128,32], index: 1, kind: input, shape index: {}]
  %s2 = inlined_call_operand.vmem [shape: s32[8,1], index: 2, kind: input, shape index: {}]
  %s3 = inlined_call_operand.hbm [shape: f32[8,128], index: 3, kind: output, shape index: {}]
  %s4 = sld [smem:[#allocation0]]
  $region22: #{tpu_custom_call.1} parent=0
    _
  %s6 = ssub.s32 1, %s4
  %s7 = scalar_select 0, %s6, %s4
  $region1: #{tpu_custom_call.1} parent=0
    #allocation2 [shape = 'u8[4096]{0}', space=vmem, size = 0x1000, scoped, tag = 'output window, operand 0, single buffered']
    #allocation3 [shape = 's32[1]{0}', space=sflag, size = 0x4, scoped, tag = 'scoped memory for tpu_custom_call.1']
    %8 = vsyncpa [#allocation3], 0
    // Predicated region
    $region2: #{tpu_custom_call.1} parent=1 // pred_check
      _
    $region3: #{tpu_custom_call.1} parent=1 // pred_check_branch
      %10 = sbr.rel (0) target = $region5
    $region4: #{tpu_custom_call.1} parent=1 // pred_region
      _
    $region5: #{tpu_custom_call.1} parent=1 // pred_fallthru
      _
    // Predicated region
    $region6: #{tpu_custom_call.1} parent=1 // pred_check
      _
    $region7: #{tpu_custom_call.1} parent=1 // pred_check_branch
      %12 = sbr.rel (0) target = $region9
    $region8: #{tpu_custom_call.1} parent=1 // pred_region
      _
    $region9: #{tpu_custom_call.1} parent=1 // pred_fallthru
      _
    // Predicated region
    $region10: #{tpu_custom_call.1} parent=1 // pred_check
      _
    $region11: #{tpu_custom_call.1} parent=1 // pred_check_branch
      %14 = sbr.rel (0) target = $region13
    $region12: #{tpu_custom_call.1} parent=1 // pred_region
      _
    $region13: #{tpu_custom_call.1} parent=1 // pred_fallthru
      _
    %v15 = vld [vmem:[%s0] sm:$0xff]
    %v16 = vld [vmem:[%s1] sm:$0xff]
    %v17 = vld [vmem:[%s1 + $0x8] sm:$0xff]
    %v18 = vld [vmem:[%s1 + $0x10] sm:$0xff]
    %v19 = vld [vmem:[%s1 + $0x18] sm:$0xff]
    %v20 = vld [vmem:[%s1 + $0x20] sm:$0xff]
    %v21 = vld [vmem:[%s1 + $0x28] sm:$0xff]
    %v22 = vld [vmem:[%s1 + $0x30] sm:$0xff]
    %v23 = vld [vmem:[%s1 + $0x38] sm:$0xff]
    %v24 = vld [vmem:[%s1 + $0x40] sm:$0xff]
    %v25 = vld [vmem:[%s1 + $0x48] sm:$0xff]
    %v26 = vld [vmem:[%s1 + $0x50] sm:$0xff]
    %v27 = vld [vmem:[%s1 + $0x58] sm:$0xff]
    %v28 = vld [vmem:[%s1 + $0x60] sm:$0xff]
    %v29 = vld [vmem:[%s1 + $0x68] sm:$0xff]
    %v30 = vld [vmem:[%s1 + $0x70] sm:$0xff]
    %v31 = vld [vmem:[%s1 + $0x78] sm:$0xff]
    %v32 = vmul.f32 %v15, %v15
    %vm33 = vcmask 261120
    %v34 = vsel %vm33, %v32, 0.0
    %35 = vadd.xlane.f32.xlu0 %v34
    %v36 = vpop.xlane.xlu0 %35
    %v37 = vmax.f32 %v36, 1e-24
    %v38 = vrsqrt.pop %v37
    %v39 = vmul.f32 %v16, %v16
    %v40 = vmul.f32 %v17, %v17
    %v41 = vmul.f32 %v18, %v18
    %v42 = vmul.f32 %v19, %v19
    %v43 = vmul.f32 %v20, %v20
    %v44 = vmul.f32 %v21, %v21
    %v45 = vmul.f32 %v22, %v22
    %v46 = vmul.f32 %v23, %v23
    %v47 = vmul.f32 %v24, %v24
    %v48 = vmul.f32 %v25, %v25
    %v49 = vmul.f32 %v26, %v26
    %v50 = vmul.f32 %v27, %v27
    %v51 = vmul.f32 %v28, %v28
    %v52 = vmul.f32 %v29, %v29
    %v53 = vmul.f32 %v30, %v30
    %v54 = vmul.f32 %v31, %v31
    %v56 = vsel %vm33, 1.0, 0
    %v59 = vsel %vm33, %v39, 0
    %v62 = vsel %vm33, %v40, 0
    %v65 = vsel %vm33, %v41, 0
    %v68 = vsel %vm33, %v42, 0
    %v71 = vsel %vm33, %v43, 0
    %v74 = vsel %vm33, %v44, 0
    %v77 = vsel %vm33, %v45, 0
    %v80 = vsel %vm33, %v46, 0
    %v83 = vsel %vm33, %v47, 0
    %v86 = vsel %vm33, %v48, 0
    %v89 = vsel %vm33, %v49, 0
    %v92 = vsel %vm33, %v50, 0
    %v95 = vsel %vm33, %v51, 0
    %v98 = vsel %vm33, %v52, 0
    %v101 = vsel %vm33, %v53, 0
    %v104 = vsel %vm33, %v54, 0
    %106 = vmatprep.subr.mxu0 0.0
    %107 = vmatpush1.xpose.msra.mxu0 %v59
    %108 = vmatprep.subr.mxu0 0.0
    %109 = vmatpush1.xpose.msra.mxu0 %v62
    %110 = vmatprep.subr.mxu0 0.0
    %111 = vmatpush1.xpose.msra.mxu0 %v65
    %112 = vmatprep.subr.mxu0 0.0
    %113 = vmatpush1.xpose.msra.mxu0 %v68
    %114 = vmatprep.subr.mxu0 0.0
    %115 = vmatpush1.xpose.msra.mxu0 %v71
    %116 = vmatprep.subr.mxu0 0.0
    %117 = vmatpush1.xpose.msra.mxu0 %v74
    %118 = vmatprep.subr.mxu0 0.0
    %119 = vmatpush1.xpose.msra.mxu0 %v77
    %120 = vmatprep.subr.mxu0 0.0
    %121 = vmatpush1.xpose.msra.mxu0 %v80
    %122 = vmatprep.subr.mxu0 0.0
    %123 = vmatpush1.xpose.msra.mxu0 %v83
    %124 = vmatprep.subr.mxu0 0.0
    %125 = vmatpush1.xpose.msra.mxu0 %v86
    %126 = vmatprep.subr.mxu0 0.0
    %127 = vmatpush1.xpose.msra.mxu0 %v89
    %128 = vmatprep.subr.mxu0 0.0
    %129 = vmatpush1.xpose.msra.mxu0 %v92
    %130 = vmatprep.subr.mxu0 0.0
    %131 = vmatpush1.xpose.msra.mxu0 %v95
    %132 = vmatprep.subr.mxu0 0.0
    %133 = vmatpush1.xpose.msra.mxu0 %v98
    %134 = vmatprep.subr.mxu0 0.0
    %135 = vmatpush1.xpose.msra.mxu0 %v101
    %136 = vmatprep.subr.mxu0 0.0
    %137 = vmatpush1.xpose.msra.mxu0 %v104
    %138 = vmatprep.subr.mxu0 0.0
    %139 = vmatpush1.xpose.msra.mxu0 0.0
    %140 = vmatprep.subr.mxu0 0.0
    %141 = vmatpush1.xpose.msra.mxu0 0.0
    %142 = vmatprep.subr.mxu0 0.0
    %143 = vmatpush1.xpose.msra.mxu0 0.0
    %144 = vmatprep.subr.mxu0 0.0
    %145 = vmatpush1.xpose.msra.mxu0 0.0
    %146 = vmatprep.subr.mxu0 0.0
    %147 = vmatpush1.xpose.msra.mxu0 0.0
    %148 = vmatprep.subr.mxu0 0.0
    %149 = vmatpush1.xpose.msra.mxu0 0.0
    %150 = vmatprep.subr.mxu0 0.0
    %151 = vmatpush1.xpose.msra.mxu0 0.0
    %152 = vmatprep.subr.mxu0 0.0
    %153 = vmatpush1.xpose.msra.mxu0 0.0
    %154 = vmatprep.subr.mxu0 0.0
    %155 = vmatpush1.xpose.msra.mxu0 0.0
    %156 = vmatprep.subr.mxu0 0.0
    %157 = vmatpush1.xpose.msra.mxu0 0.0
    %158 = vmatprep.subr.mxu0 0.0
    %159 = vmatpush1.xpose.msra.mxu0 0.0
    %160 = vmatprep.subr.mxu0 0.0
    %161 = vmatpush1.xpose.msra.mxu0 0.0
    %162 = vmatprep.subr.mxu0 0.0
    %163 = vmatpush1.xpose.msra.mxu0 0.0
    %164 = vmatprep.subr.mxu0 0.0
    %165 = vmatpush1.xpose.msra.mxu0 0.0
    %166 = vmatprep.subr.mxu0 0.0
    %167 = vmatpush1.xpose.msra.mxu0 0.0
    %168 = vmatprep.subr.mxu0 0.0
    %169 = vmatpush1.xpose.msra.mxu0 0.0
    %170 = vmatprep.mubr.f32.mxu0 0.0
    %171 = vmatmul.mubr.f32.gmra.mrb[0].mxu0 %v56
    %v172 = vpop.f32.mrb[0].mxu0
    %v173 = vadd.f32 0.0, %v172
    %v174 = vpop.f32.mrb[0].mxu0
    %175 = vdwg.mxu0
    %v176 = vmax.f32 %v173, 1e-24
    %v177 = vrsqrt.pop %v176
    %v179 = vsel %vm33, %v15, 0
    %v182 = vsel %vm33, %v16, 0
    %v185 = vsel %vm33, %v17, 0
    %v188 = vsel %vm33, %v18, 0
    %v191 = vsel %vm33, %v19, 0
    %v194 = vsel %vm33, %v20, 0
    %v197 = vsel %vm33, %v21, 0
    %v200 = vsel %vm33, %v22, 0
    %v203 = vsel %vm33, %v23, 0
    %v206 = vsel %vm33, %v24, 0
    %v209 = vsel %vm33, %v25, 0
    %v212 = vsel %vm33, %v26, 0
    %v215 = vsel %vm33, %v27, 0
    %v218 = vsel %vm33, %v28, 0
    %v221 = vsel %vm33, %v29, 0
    %v224 = vsel %vm33, %v30, 0
    %v227 = vsel %vm33, %v31, 0
    %229 = vmatprep.subr.mxu0 0.0
    %230 = vmatpush1.xpose.msra.mxu0 %v182
    %231 = vmatprep.subr.mxu0 0.0
    %232 = vmatpush1.xpose.msra.mxu0 %v185
    %233 = vmatprep.subr.mxu0 0.0
    %234 = vmatpush1.xpose.msra.mxu0 %v188
    %235 = vmatprep.subr.mxu0 0.0
    %236 = vmatpush1.xpose.msra.mxu0 %v191
    %237 = vmatprep.subr.mxu0 0.0
    %238 = vmatpush1.xpose.msra.mxu0 %v194
    %239 = vmatprep.subr.mxu0 0.0
    %240 = vmatpush1.xpose.msra.mxu0 %v197
    %241 = vmatprep.subr.mxu0 0.0
    %242 = vmatpush1.xpose.msra.mxu0 %v200
    %243 = vmatprep.subr.mxu0 0.0
    %244 = vmatpush1.xpose.msra.mxu0 %v203
    %245 = vmatprep.subr.mxu0 0.0
    %246 = vmatpush1.xpose.msra.mxu0 %v206
    %247 = vmatprep.subr.mxu0 0.0
    %248 = vmatpush1.xpose.msra.mxu0 %v209
    %249 = vmatprep.subr.mxu0 0.0
    %250 = vmatpush1.xpose.msra.mxu0 %v212
    %251 = vmatprep.subr.mxu0 0.0
    %252 = vmatpush1.xpose.msra.mxu0 %v215
    %253 = vmatprep.subr.mxu0 0.0
    %254 = vmatpush1.xpose.msra.mxu0 %v218
    %255 = vmatprep.subr.mxu0 0.0
    %256 = vmatpush1.xpose.msra.mxu0 %v221
    %257 = vmatprep.subr.mxu0 0.0
    %258 = vmatpush1.xpose.msra.mxu0 %v224
    %259 = vmatprep.subr.mxu0 0.0
    %260 = vmatpush1.xpose.msra.mxu0 %v227
    %261 = vmatprep.subr.mxu0 0.0
    %262 = vmatpush1.xpose.msra.mxu0 0.0
    %263 = vmatprep.subr.mxu0 0.0
    %264 = vmatpush1.xpose.msra.mxu0 0.0
    %265 = vmatprep.subr.mxu0 0.0
    %266 = vmatpush1.xpose.msra.mxu0 0.0
    %267 = vmatprep.subr.mxu0 0.0
    %268 = vmatpush1.xpose.msra.mxu0 0.0
    %269 = vmatprep.subr.mxu0 0.0
    %270 = vmatpush1.xpose.msra.mxu0 0.0
    %271 = vmatprep.subr.mxu0 0.0
    %272 = vmatpush1.xpose.msra.mxu0 0.0
    %273 = vmatprep.subr.mxu0 0.0
    %274 = vmatpush1.xpose.msra.mxu0 0.0
    %275 = vmatprep.subr.mxu0 0.0
    %276 = vmatpush1.xpose.msra.mxu0 0.0
    %277 = vmatprep.subr.mxu0 0.0
    %278 = vmatpush1.xpose.msra.mxu0 0.0
    %279 = vmatprep.subr.mxu0 0.0
    %280 = vmatpush1.xpose.msra.mxu0 0.0
    %281 = vmatprep.subr.mxu0 0.0
    %282 = vmatpush1.xpose.msra.mxu0 0.0
    %283 = vmatprep.subr.mxu0 0.0
    %284 = vmatpush1.xpose.msra.mxu0 0.0
    %285 = vmatprep.subr.mxu0 0.0
    %286 = vmatpush1.xpose.msra.mxu0 0.0
    %287 = vmatprep.subr.mxu0 0.0
    %288 = vmatpush1.xpose.msra.mxu0 0.0
    %289 = vmatprep.subr.mxu0 0.0
    %290 = vmatpush1.xpose.msra.mxu0 0.0
    %291 = vmatprep.subr.mxu0 0.0
    %292 = vmatpush1.xpose.msra.mxu0 0.0
    %293 = vmatprep.mubr.f32.mxu0 0.0
    %294 = vmatmul.mubr.f32.gmra.mrb[0].mxu0 %v179
    %v295 = vpop.f32.mrb[0].mxu0
    %v296 = vadd.f32 0.0, %v295
    %v297 = vpop.f32.mrb[0].mxu0
    %298 = vdwg.mxu0
    %v299 = vmul.f32 %v296, %v38
    %v300 = vlaneseq
    %v301 = vshrl.u32 %v300, 7
    %v302 = vsub.s32 0, %v301
    %v303 = vrot.slane %v177, %v302
    %v304 = vmul.f32 %v299, %v303
    %v305 = vld [vmem:[%s2] sm:$0xff]
    %s306 = smul.u32 0, 128
    %v307 = vlaneseq
    %v308 = vand.u32 %v307, 127
    %v309 = vstv %s306
    %v310 = vadd.s32 %v309, %v308
    %311 = vset.pattern.permute.xlu0 0
    %312 = vperm.xlu0 %311, %v305
    %v313 = vpop.permute.xlu0 %312
    %vm314 = vcmp.eq.s32.totalorder %v310, %v313
    %v315 = vsel %vm314, %v304, 0.0
    %316 = vadd.xlane.f32.xlu0 %v315
    %v317 = vpop.xlane.xlu0 %316
    %v318 = vmul.f32 %v317, %v317
    %v319 = vsub.f32 1.0, %v318
    %v320 = vmax.f32 %v319, 0.0
    %v321 = vrsqrt.pop %v320
    %v322 = vmul.f32 %v320, %v321
    %vm323 = vcmp.eq.f32.partialorder %v320, inf
    %v324 = vsel %vm323, %v320, %v322
    %vm325 = vcmp.eq.f32.partialorder %v320, 0.0
    %v326 = vand.u32 %v320, 2147483648
    %v327 = vsel %vm325, %v326, %v324
    %v328 = vmul.f32 %v317, 0.87758255
    %v329 = vmul.f32 %v327, 0.47942555
    %v330 = vsub.f32 %v328, %v329
    %vm331 = vcmp.gt.f32.partialorder %v317, -0.87758255
    %v332 = vsub.f32 %v317, 0.23971277
    %v333 = vsel %vm331, %v330, %v332
    %v334 = vsub.f32 %v333, %v317
    %v335 = vsel %vm314, %v334, 0.0
    %v336 = vadd.f32 %v304, %v335
    %v337 = vmul.f32 %v336, 30.0
    %338 = vst [vmem:[#allocation2] sm:$0xff] %v337
    // Predicated region
    $region14: #{tpu_custom_call.1} parent=1 // pred_check
      _
    $region15: #{tpu_custom_call.1} parent=1 // pred_check_branch
      %340 = sbr.rel (0) target = $region17
    $region16: #{tpu_custom_call.1} parent=1 // pred_region
      %s342 = ssub.s32 128, 128
      %343 = vsyncadd [#allocation3], %s342
      %s345 = sshll.u32 [#allocation2], 4
      %s346 = int_to_ptr.vmem [resolvable:$true] %s345
      %348 = dma.vmem_to_hbm [thread:$0]  %s346, 128, %s3, [#allocation3]
    $region17: #{tpu_custom_call.1} parent=1 // pred_fallthru
      _
    // Predicated region
    $region18: #{tpu_custom_call.1} parent=1 // pred_check
      _
    $region19: #{tpu_custom_call.1} parent=1 // pred_check_branch
      %350 = sbr.rel (0) target = $region21
    $region20: #{tpu_custom_call.1} parent=1 // pred_region
      %351 = dma.done [#allocation3], 128
    $region21: #{tpu_custom_call.1} parent=1 // pred_fallthru
      _
    %352 = vsyncpa [#allocation3], 1

</llo_original>
